<compile_context>
chip_gen: v6e
topology: v6e:2x2x1
jax: 0.10.0
libtpu: 0.0.40
codegen_flags: <defaults>
</compile_context>

<pallas_src>
import jax
import jax.numpy as jnp
import numpy as np
from jax.experimental import pallas as pl
from jax.experimental.pallas import tpu as pltpu

HIDDEN_SIZE = 128       # Net.output_size (module default is 512; any value works)
GOAL_HIDDEN = 128       # fixed in the module (self.goal_hidden_size = 128)
GOAL_DIM = 4            # goal_linear input dim


def _round_up(x, m):
    return (x + m - 1) // m * m


def _value_head_kernel(base_ref, arm_ref, goal_ref,
                       wb_ref, wa_ref, wg_ref, b_ref, out_ref):
    """Fused value head on one batch tile.

    base/arm terms: [tb,H]@[H,1] MXU dots with f32 accumulation (bf16 or f32 LHS,
    weights pre-cast to the feature dtype). Goal term (K=4) stays on the VPU with a
    4-lane reduce; it is cast to f32 in-kernel (v5e has no bf16 VPU).
    """
    v = jnp.dot(base_ref[...], wb_ref[...], preferred_element_type=jnp.float32)   # [tb,1]
    v = v + jnp.dot(arm_ref[...], wa_ref[...], preferred_element_type=jnp.float32)
    g = goal_ref[...].astype(jnp.float32)                                          # [tb,4]
    v = v + jnp.sum(g * wg_ref[...], axis=-1, keepdims=True)                       # [tb,1]
    out_ref[...] = v + b_ref[...]


def fold_value_head_params(params, hidden_size=HIDDEN_SIZE,
                           feature_dtype=jnp.float32):
    """One-time algebraic fold of goal_linear into critic_linear (outside hot path).

    critic(cat([base, arm, goal@Wg + bg])) ==
        base @ Wc_base + arm @ Wc_arm + goal @ (Wg @ Wc_goal) + (bg @ Wc_goal + bc)

    wb/wa are kept as [H,1] columns (MXU RHS) in the feature dtype so the in-kernel
    dot is MXU-native (bf16 or f32).
    """
    H = hidden_size
    wc = params["critic_w"].astype(jnp.float32)            # [2H + GOAL_HIDDEN, 1]
    wc_goal = wc[2 * H:, :]                                 # [GOAL_HIDDEN, 1]
    wg = (params["goal_w"].astype(jnp.float32) @ wc_goal)   # [GOAL_DIM, 1]
    b = (params["goal_b"].astype(jnp.float32) @ wc_goal
         + params["critic_b"].astype(jnp.float32))          # [1, 1]
    return {
        "wb": wc[:H, :].astype(feature_dtype),                       # [H, 1]
        "wa": wc[H:2 * H, :].astype(feature_dtype),                  # [H, 1]
        "wg": wg.reshape(1, GOAL_DIM).astype(jnp.float32),           # [1, 4]
        "b": b.reshape(1, 1).astype(jnp.float32),                    # [1, 1]
    }


def policy_get_value(base_feat, arm_feat, goal, folded, *, block_rows=2048):
    """Pallas implementation of Policy.get_value (split_network=True), given actor
    features already produced by base_net / arm_net and folded params from
    fold_value_head_params(). No wrapper-side copies: no pad, no cast, no slice."""
    B, H = base_feat.shape
    assert arm_feat.shape == (B, H)
    assert goal.shape == (B, GOAL_DIM)

    # Batch tile: multiple of 8 sublanes, capped so the grid has >=2 steps whenever
    # B > 8 (both v7x TensorCores get work); big default amortizes per-step overhead.
    block_rows = max(8, _round_up(block_rows, 8))
    tb = min(block_rows, max(8, _round_up(pl.cdiv(B, 2), 8)))
    grid = (pl.cdiv(B, tb),)   # partial last block is masked by Pallas

    row_spec = lambda cols: pl.BlockSpec((tb, cols), lambda i: (i, 0))
    const_spec = lambda shape: pl.BlockSpec(shape, lambda i: (0, 0))  # VMEM-resident

    return pl.pallas_call(
        _value_head_kernel,
        out_shape=jax.ShapeDtypeStruct((B, 1), jnp.float32),
        grid=grid,
        in_specs=[
            row_spec(H),                 # base features [B, H]   -> (tb, H)
            row_spec(H),                 # arm features  [B, H]   -> (tb, H)
            row_spec(GOAL_DIM),          # goal          [B, 4]   -> (tb, 4)
            const_spec((H, 1)),          # critic column for base (resident)
            const_spec((H, 1)),          # critic column for arm  (resident)
            const_spec((1, GOAL_DIM)),   # folded goal weight     (resident)
            const_spec((1, 1)),          # folded bias            (resident)
        ],
        out_specs=row_spec(1),
        compiler_params=pltpu.CompilerParams(
            dimension_semantics=("parallel",)),   # megacore-shard batch on v7x
    )(base_feat, arm_feat, goal,
      folded["wb"], folded["wa"], folded["wg"], folded["b"])


def init_params(key, hidden_size=HIDDEN_SIZE):
    """Parameter init mirroring the module's __init__ shapes.

    goal_linear: default nn.Linear-style uniform init.
    critic_linear: orthogonal weight (gain=1) — for out_features=1 a unit-norm row —
    and zero bias.
    """
    k1, k2, k3 = jax.random.split(key, 3)
    in_critic = 2 * hidden_size + GOAL_HIDDEN

    bound = 1.0 / np.sqrt(GOAL_DIM)
    goal_w = jax.random.uniform(k1, (GOAL_DIM, GOAL_HIDDEN),
                                minval=-bound, maxval=bound, dtype=jnp.float32)
    goal_b = jax.random.uniform(k2, (1, GOAL_HIDDEN),
                                minval=-bound, maxval=bound, dtype=jnp.float32)

    row = jax.random.normal(k3, (in_critic, 1), dtype=jnp.float32)
    critic_w = row / jnp.linalg.norm(row)          # orthogonal_(gain=1), single row
    critic_b = jnp.zeros((1, 1), dtype=jnp.float32)

    return {"goal_w": goal_w, "goal_b": goal_b,
            "critic_w": critic_w, "critic_b": critic_b}


def reference_get_value(base_feat, arm_feat, goal, params):
    """Pure-JAX reference matching the PyTorch forward exactly (no fold)."""
    goal_emb = goal @ params["goal_w"] + params["goal_b"]
    feats = jnp.concatenate([base_feat.astype(jnp.float32),
                             arm_feat.astype(jnp.float32), goal_emb], axis=1)
    return feats @ params["critic_w"] + params["critic_b"]


if __name__ == "__main__":
    key = jax.random.PRNGKey(0)
    k_b, k_a, k_g, k_p = jax.random.split(key, 4)

    # B=20 exercises both a >=2-step grid (tb=16) and a masked partial last block.
    B = 20
    base_feat = jax.random.normal(k_b, (B, HIDDEN_SIZE), dtype=jnp.float32)
    arm_feat = jax.random.normal(k_a, (B, HIDDEN_SIZE), dtype=jnp.float32)
    goal = jax.random.normal(k_g, (B, GOAL_DIM), dtype=jnp.float32)
    params = init_params(k_p)

    ref = reference_get_value(base_feat, arm_feat, goal, params)

    # f32 feature path — exact (to tolerance) vs. the unfused reference.
    folded_f32 = fold_value_head_params(params, HIDDEN_SIZE, jnp.float32)
    value = jax.block_until_ready(
        policy_get_value(base_feat, arm_feat, goal, folded_f32))
    np.testing.assert_allclose(np.asarray(value), np.asarray(ref),
                               rtol=1e-5, atol=1e-5)

    # bf16 feature-streaming path (halves the dominant HBM streams; MXU-native).
    folded_bf16 = fold_value_head_params(params, HIDDEN_SIZE, jnp.bfloat16)
    value_bf16 = jax.block_until_ready(
        policy_get_value(base_feat.astype(jnp.bfloat16),
                         arm_feat.astype(jnp.bfloat16), goal, folded_bf16))
    np.testing.assert_allclose(np.asarray(value_bf16), np.asarray(ref),
                               rtol=5e-2, atol=5e-2)

    print("KERNEL_OK")
</pallas_src>

<mosaic_0001>
module attributes {stable_mosaic.version = 11 : i64} {
  func.func @_value_head_kernel(%arg0: i32, %arg1: memref<16x128xf32, #tpu.memory_space<vmem>>, %arg2: memref<16x128xf32, #tpu.memory_space<vmem>>, %arg3: memref<16x4xf32, #tpu.memory_space<vmem>>, %arg4: memref<128x1xf32, #tpu.memory_space<vmem>>, %arg5: memref<128x1xf32, #tpu.memory_space<vmem>>, %arg6: memref<1x4xf32, #tpu.memory_space<vmem>>, %arg7: memref<1x1xf32, #tpu.memory_space<vmem>>, %arg8: memref<16x1xf32, #tpu.memory_space<vmem>>) attributes {dimension_semantics = [#tpu.dimension_semantics<parallel>], iteration_bounds = array<i64: 2>, scalar_prefetch = 0 : i64, scratch_operands = 0 : i64, tpu.core_type = #tpu.core_type<tc>, window_params = [{transform_indices = @transform_0, window_bounds = array<i64: 16, 128>}, {transform_indices = @transform_1, window_bounds = array<i64: 16, 128>}, {transform_indices = @transform_2, window_bounds = array<i64: 16, 4>}, {pipeline_mode = #tpu.pipeline_mode<synchronous>, transform_indices = @transform_3, window_bounds = array<i64: 128, 1>}, {pipeline_mode = #tpu.pipeline_mode<synchronous>, transform_indices = @transform_4, window_bounds = array<i64: 128, 1>}, {pipeline_mode = #tpu.pipeline_mode<synchronous>, transform_indices = @transform_5, window_bounds = array<i64: 1, 4>}, {pipeline_mode = #tpu.pipeline_mode<synchronous>, transform_indices = @transform_6, window_bounds = array<i64: 1, 1>}, {transform_indices = @transform_7, window_bounds = array<i64: 16, 1>}]} {
    %c0 = arith.constant 0 : index
    %c0_0 = arith.constant 0 : index
    %0 = vector.load %arg1[%c0, %c0_0] : memref<16x128xf32, #tpu.memory_space<vmem>>, vector<16x128xf32>
    %c0_1 = arith.constant 0 : index
    %c0_2 = arith.constant 0 : index
    %1 = vector.load %arg4[%c0_1, %c0_2] : memref<128x1xf32, #tpu.memory_space<vmem>>, vector<128x1xf32>
    %cst = arith.constant dense<0.000000e+00> : vector<16x1xf32>
    %2 = tpu.matmul %0, %1, %cst {dimension_numbers = #tpu.dot_dimension_numbers<[1], [0], [0], [1], [0, 0, 1, 1], [], []>} : vector<16x128xf32>, vector<128x1xf32>, vector<16x1xf32> -> vector<16x1xf32>
    %c0_3 = arith.constant 0 : index
    %c0_4 = arith.constant 0 : index
    %3 = vector.load %arg2[%c0_3, %c0_4] : memref<16x128xf32, #tpu.memory_space<vmem>>, vector<16x128xf32>
    %c0_5 = arith.constant 0 : index
    %c0_6 = arith.constant 0 : index
    %4 = vector.load %arg5[%c0_5, %c0_6] : memref<128x1xf32, #tpu.memory_space<vmem>>, vector<128x1xf32>
    %cst_7 = arith.constant dense<0.000000e+00> : vector<16x1xf32>
    %5 = tpu.matmul %3, %4, %cst_7 {dimension_numbers = #tpu.dot_dimension_numbers<[1], [0], [0], [1], [0, 0, 1, 1], [], []>} : vector<16x128xf32>, vector<128x1xf32>, vector<16x1xf32> -> vector<16x1xf32>
    %6 = arith.addf %2, %5 : vector<16x1xf32>
    %c0_8 = arith.constant 0 : index
    %c0_9 = arith.constant 0 : index
    %7 = vector.load %arg3[%c0_8, %c0_9] : memref<16x4xf32, #tpu.memory_space<vmem>>, vector<16x4xf32>
    %c0_10 = arith.constant 0 : index
    %c0_11 = arith.constant 0 : index
    %8 = vector.load %arg6[%c0_10, %c0_11] : memref<1x4xf32, #tpu.memory_space<vmem>>, vector<1x4xf32>
    %9 = vector.broadcast %8 : vector<1x4xf32> to vector<16x4xf32>
    %10 = arith.mulf %7, %9 : vector<16x4xf32>
    %cst_12 = arith.constant dense<0.000000e+00> : vector<16xf32>
    %11 = vector.multi_reduction <add>, %10, %cst_12 [1] : vector<16x4xf32> to vector<16xf32>
    %12 = vector.shape_cast %11 : vector<16xf32> to vector<16x1xf32>
    %13 = arith.addf %6, %12 : vector<16x1xf32>
    %c0_13 = arith.constant 0 : index
    %c0_14 = arith.constant 0 : index
    %14 = vector.load %arg7[%c0_13, %c0_14] : memref<1x1xf32, #tpu.memory_space<vmem>>, vector<1x1xf32>
    %15 = vector.broadcast %14 : vector<1x1xf32> to vector<16x1xf32>
    %16 = arith.addf %13, %15 : vector<16x1xf32>
    %c0_15 = arith.constant 0 : index
    %c0_16 = arith.constant 0 : index
    %17 = vector.load %arg8[%c0_15, %c0_16] : memref<16x1xf32, #tpu.memory_space<vmem>>, vector<16x1xf32>
    tpu.vector_store %arg8[%c0_15, %c0_16], %16 {strides = array<i32>} : memref<16x1xf32, #tpu.memory_space<vmem>>, vector<16x1xf32>,
    return
  }
  func.func @transform_0(%arg0: i32) -> (i32, i32) {
    %c0_i32 = arith.constant 0 : i32
    %c0_i32_0 = arith.constant 0 : i32
    return %arg0, %c0_i32 : i32, i32
  }
  func.func @transform_1(%arg0: i32) -> (i32, i32) {
    %c0_i32 = arith.constant 0 : i32
    %c0_i32_0 = arith.constant 0 : i32
    return %arg0, %c0_i32 : i32, i32
  }
  func.func @transform_2(%arg0: i32) -> (i32, i32) {
    %c0_i32 = arith.constant 0 : i32
    %c0_i32_0 = arith.constant 0 : i32
    return %arg0, %c0_i32 : i32, i32
  }
  func.func @transform_3(%arg0: i32) -> (i32, i32) {
    %c0_i32 = arith.constant 0 : i32
    %c0_i32_0 = arith.constant 0 : i32
    %c0_i32_1 = arith.constant 0 : i32
    return %c0_i32, %c0_i32_0 : i32, i32
  }
  func.func @transform_4(%arg0: i32) -> (i32, i32) {
    %c0_i32 = arith.constant 0 : i32
    %c0_i32_0 = arith.constant 0 : i32
    %c0_i32_1 = arith.constant 0 : i32
    return %c0_i32, %c0_i32_0 : i32, i32
  }
  func.func @transform_5(%arg0: i32) -> (i32, i32) {
    %c0_i32 = arith.constant 0 : i32
    %c0_i32_0 = arith.constant 0 : i32
    %c0_i32_1 = arith.constant 0 : i32
    return %c0_i32, %c0_i32_0 : i32, i32
  }
  func.func @transform_6(%arg0: i32) -> (i32, i32) {
    %c0_i32 = arith.constant 0 : i32
    %c0_i32_0 = arith.constant 0 : i32
    %c0_i32_1 = arith.constant 0 : i32
    return %c0_i32, %c0_i32_0 : i32, i32
  }
  func.func @transform_7(%arg0: i32) -> (i32, i32) {
    %c0_i32 = arith.constant 0 : i32
    %c0_i32_0 = arith.constant 0 : i32
    return %arg0, %c0_i32 : i32, i32
  }
}

</mosaic_0001>

<llo_original>
// kernel: tpu_custom_call.1
$region0: #{tpu_custom_call.1}
  #allocation0 [shape = 'u32[]', space=smem, size = 0x4, offset = 0x4, fixed_abs, tag = 'smem constant byte address 0x4 - core index']
  #allocation1 [shape = 'u32[144,128]{1,0:T(1,128)}', space=vmem, size = 0x12000, scoped, tag = 'internal scratch']
  #allocation2 [shape = 'f32[1,1]{1,0:T(1,128)S(1)}', space=vmem, size = 0x200, scoped, tag = 'scoped memory for tpu_custom_call.1']
  %s0 = inlined_call_operand.vmem [shape: f32[20,128], index: 0, kind: input, shape index: {}]
  %s1 = inlined_call_operand.vmem [shape: f32[20,128], index: 1, kind: input, shape index: {}]
  %s2 = inlined_call_operand.vmem [shape: f32[20,4], index: 2, kind: input, shape index: {}]
  %s3 = inlined_call_operand.vmem [shape: f32[128,1], index: 3, kind: input, shape index: {}]
  %s4 = inlined_call_operand.vmem [shape: f32[128,1], index: 4, kind: input, shape index: {}]
  %s5 = inlined_call_operand.vmem [shape: f32[1,4], index: 5, kind: input, shape index: {}]
  %s6 = inlined_call_operand.<no memory space> [shape: f32[1,1], index: 6, kind: input, shape index: {}]
  %s7 = inlined_call_operand.vmem [shape: f32[20,1], index: 7, kind: output, shape index: {}]
  %s8 = sld [smem:[#allocation0]]
  $region109: #{tpu_custom_call.1} parent=0
    _
  %s10 = ssub.s32 1, %s8
  %s11 = scalar_select 0, %s10, %s8
  %v12 = vstv %s6
  %13 = vst [vmem:[#allocation2] sm:$0x1] %v12
  $region1: #{tpu_custom_call.1} parent=0
    #allocation3 [shape = 'u8[16384]{0}', space=vmem, size = 0x4000, scoped, tag = 'output window, operand 0']
    loop: start=0, step=1, limit=4
    $region2: #{tpu_custom_call.1} parent=1 // loop_pre_header
      _
    $region3: #{tpu_custom_call.1} parent=1 // loop_header
      %s15 = sphi 0, %s19
      %p16 = scmp.ge.s32.totalorder %s15, 4
      %s25 = sphi 0, %s27
      %s28 = sphi 0, %s25
      %s29 = sphi 0, %s28
      %s45 = sphi 0, %s29
      %s51 = sphi 0, %s53
      %s54 = sphi 0, %s51
      %s55 = sphi 0, %s54
      %s71 = sphi 0, %s55
      %s77 = sphi 0, %s79
      %s80 = sphi 0, %s77
      %s81 = sphi 0, %s80
      %s97 = sphi 0, %s81
      %s101 = sphi 0, %s101
      %s103 = sphi 0, %s101
      %s104 = sphi 0, %s103
      %s118 = sphi 0, %s104
      %s122 = sphi 0, %s122
      %s124 = sphi 0, %s122
      %s125 = sphi 0, %s124
      %s139 = sphi 0, %s125
      %s143 = sphi 0, %s143
      %s145 = sphi 0, %s143
      %s146 = sphi 0, %s145
      %s160 = sphi 0, %s146
      %s164 = sphi 0, %s164
      %s166 = sphi 0, %s164
      %s167 = sphi 0, %s166
      %s181 = sphi 0, %s167
      %s187 = sphi 0, %s189
      %s190 = sphi 0, %s187
      %s191 = sphi 0, %s190
      %s207 = sphi 0, %s191
    $region4: #{tpu_custom_call.1} parent=1 // loop_header_branch
      %18 = sbr.rel (%p16) target = $region8
    $region5: #{tpu_custom_call.1} parent=1 // loop_body
      %s20 = ssub.s32 %s15, 1
      %s21 = ssub.s32 %s15, 2
      %s22 = sadd.s32 %s15, 1
      %s23 = ssub.s32 %s15, %s22
      %p24 = scmp.eq.s32.totalorder %s23, 0
      %s26 = sadd.s32 %s25, 1
      %s27 = scalar_select %p24, %s25, %s26
      %p30 = pneg %p24
      %p31 = scmp.eq.s32.totalorder %s15, 1
      %p32 = por %p30, %p31
      %p33 = scmp.ne.s32.totalorder %s25, %s28
      %p34 = scmp.eq.s32.totalorder %s15, 0
      %p35 = por %p33, %p34
      %p36 = scmp.ne.s32.totalorder %s25, %s28
      %p37 = scmp.eq.s32.totalorder %s20, 1
      %p38 = por %p36, %p37
      %p39 = scmp.ne.s32.totalorder %s28, %s29
      %p40 = scmp.eq.s32.totalorder %s20, 0
      %p41 = por %p39, %p40
      %p42 = scmp.ne.s32.totalorder %s28, %s29
      %p43 = scmp.eq.s32.totalorder %s21, 1
      %p44 = por %p42, %p43
      %p46 = scmp.ne.s32.totalorder %s29, %s45
      %p47 = scmp.eq.s32.totalorder %s21, 0
      %p48 = por %p46, %p47
      %s49 = ssub.s32 %s15, %s22
      %p50 = scmp.eq.s32.totalorder %s49, 0
      %s52 = sadd.s32 %s51, 1
      %s53 = scalar_select %p50, %s51, %s52
      %p56 = pneg %p50
      %p57 = scmp.eq.s32.totalorder %s15, 1
      %p58 = por %p56, %p57
      %p59 = scmp.ne.s32.totalorder %s51, %s54
      %p60 = scmp.eq.s32.totalorder %s15, 0
      %p61 = por %p59, %p60
      %p62 = scmp.ne.s32.totalorder %s51, %s54
      %p63 = scmp.eq.s32.totalorder %s20, 1
      %p64 = por %p62, %p63
      %p65 = scmp.ne.s32.totalorder %s54, %s55
      %p66 = scmp.eq.s32.totalorder %s20, 0
      %p67 = por %p65, %p66
      %p68 = scmp.ne.s32.totalorder %s54, %s55
      %p69 = scmp.eq.s32.totalorder %s21, 1
      %p70 = por %p68, %p69
      %p72 = scmp.ne.s32.totalorder %s55, %s71
      %p73 = scmp.eq.s32.totalorder %s21, 0
      %p74 = por %p72, %p73
      %s75 = ssub.s32 %s15, %s22
      %p76 = scmp.eq.s32.totalorder %s75, 0
      %s78 = sadd.s32 %s77, 1
      %s79 = scalar_select %p76, %s77, %s78
      %p82 = pneg %p76
      %p83 = scmp.eq.s32.totalorder %s15, 1
      %p84 = por %p82, %p83
      %p85 = scmp.ne.s32.totalorder %s77, %s80
      %p86 = scmp.eq.s32.totalorder %s15, 0
      %p87 = por %p85, %p86
      %p88 = scmp.ne.s32.totalorder %s77, %s80
      %p89 = scmp.eq.s32.totalorder %s20, 1
      %p90 = por %p88, %p89
      %p91 = scmp.ne.s32.totalorder %s80, %s81
      %p92 = scmp.eq.s32.totalorder %s20, 0
      %p93 = por %p91, %p92
      %p94 = scmp.ne.s32.totalorder %s80, %s81
      %p95 = scmp.eq.s32.totalorder %s21, 1
      %p96 = por %p94, %p95
      %p98 = scmp.ne.s32.totalorder %s81, %s97
      %p99 = scmp.eq.s32.totalorder %s21, 0
      %p100 = por %p98, %p99
      %s102 = sadd.s32 %s101, 1
      %p105 = scmp.eq.s32.totalorder %s15, 1
      %p106 = scmp.ne.s32.totalorder %s101, %s103
      %p107 = scmp.eq.s32.totalorder %s15, 0
      %p108 = por %p106, %p107
      %p109 = scmp.ne.s32.totalorder %s101, %s103
      %p110 = scmp.eq.s32.totalorder %s20, 1
      %p111 = por %p109, %p110
      %p112 = scmp.ne.s32.totalorder %s103, %s104
      %p113 = scmp.eq.s32.totalorder %s20, 0
      %p114 = por %p112, %p113
      %p115 = scmp.ne.s32.totalorder %s103, %s104
      %p116 = scmp.eq.s32.totalorder %s21, 1
      %p117 = por %p115, %p116
      %p119 = scmp.ne.s32.totalorder %s104, %s118
      %p120 = scmp.eq.s32.totalorder %s21, 0
      %p121 = por %p119, %p120
      %s123 = sadd.s32 %s122, 1
      %p126 = scmp.eq.s32.totalorder %s15, 1
      %p127 = scmp.ne.s32.totalorder %s122, %s124
      %p128 = scmp.eq.s32.totalorder %s15, 0
      %p129 = por %p127, %p128
      %p130 = scmp.ne.s32.totalorder %s122, %s124
      %p131 = scmp.eq.s32.totalorder %s20, 1
      %p132 = por %p130, %p131
      %p133 = scmp.ne.s32.totalorder %s124, %s125
      %p134 = scmp.eq.s32.totalorder %s20, 0
      %p135 = por %p133, %p134
      %p136 = scmp.ne.s32.totalorder %s124, %s125
      %p137 = scmp.eq.s32.totalorder %s21, 1
      %p138 = por %p136, %p137
      %p140 = scmp.ne.s32.totalorder %s125, %s139
      %p141 = scmp.eq.s32.totalorder %s21, 0
      %p142 = por %p140, %p141
      %s144 = sadd.s32 %s143, 1
      %p147 = scmp.eq.s32.totalorder %s15, 1
      %p148 = scmp.ne.s32.totalorder %s143, %s145
      %p149 = scmp.eq.s32.totalorder %s15, 0
      %p150 = por %p148, %p149
      %p151 = scmp.ne.s32.totalorder %s143, %s145
      %p152 = scmp.eq.s32.totalorder %s20, 1
      %p153 = por %p151, %p152
      %p154 = scmp.ne.s32.totalorder %s145, %s146
      %p155 = scmp.eq.s32.totalorder %s20, 0
      %p156 = por %p154, %p155
      %p157 = scmp.ne.s32.totalorder %s145, %s146
      %p158 = scmp.eq.s32.totalorder %s21, 1
      %p159 = por %p157, %p158
      %p161 = scmp.ne.s32.totalorder %s146, %s160
      %p162 = scmp.eq.s32.totalorder %s21, 0
      %p163 = por %p161, %p162
      %s165 = sadd.s32 %s164, 1
      %p168 = scmp.eq.s32.totalorder %s15, 1
      %p169 = scmp.ne.s32.totalorder %s164, %s166
      %p170 = scmp.eq.s32.totalorder %s15, 0
      %p171 = por %p169, %p170
      %p172 = scmp.ne.s32.totalorder %s164, %s166
      %p173 = scmp.eq.s32.totalorder %s20, 1
      %p174 = por %p172, %p173
      %p175 = scmp.ne.s32.totalorder %s166, %s167
      %p176 = scmp.eq.s32.totalorder %s20, 0
      %p177 = por %p175, %p176
      %p178 = scmp.ne.s32.totalorder %s166, %s167
      %p179 = scmp.eq.s32.totalorder %s21, 1
      %p180 = por %p178, %p179
      %p182 = scmp.ne.s32.totalorder %s167, %s181
      %p183 = scmp.eq.s32.totalorder %s21, 0
      %p184 = por %p182, %p183
      %s185 = ssub.s32 %s15, %s22
      %p186 = scmp.eq.s32.totalorder %s185, 0
      %s188 = sadd.s32 %s187, 1
      %s189 = scalar_select %p186, %s187, %s188
      %p192 = pneg %p186
      %p193 = scmp.eq.s32.totalorder %s15, 1
      %p194 = por %p192, %p193
      %p195 = scmp.ne.s32.totalorder %s187, %s190
      %p196 = scmp.eq.s32.totalorder %s15, 0
      %p197 = por %p195, %p196
      %p198 = scmp.ne.s32.totalorder %s187, %s190
      %p199 = scmp.eq.s32.totalorder %s20, 1
      %p200 = por %p198, %p199
      %p201 = scmp.ne.s32.totalorder %s190, %s191
      %p202 = scmp.eq.s32.totalorder %s20, 0
      %p203 = por %p201, %p202
      %p204 = scmp.ne.s32.totalorder %s190, %s191
      %p205 = scmp.eq.s32.totalorder %s21, 1
      %p206 = por %p204, %p205
      %p208 = scmp.ne.s32.totalorder %s191, %s207
      %p209 = scmp.eq.s32.totalorder %s21, 0
      %p210 = por %p208, %p209
      %p211 = scmp.le.s32.totalorder 1, %s15
      %p212 = scmp.lt.s32.totalorder %s15, 3
      %p213 = pnand %p211, %p212
      %p214 = pneg %p213
      // Predicated region
      $region9: #{tpu_custom_call.1} parent=5 // pred_check
        _
      $region10: #{tpu_custom_call.1} parent=5 // pred_check_branch
        %216 = sbr.rel (%p213) target = $region12
      $region11: #{tpu_custom_call.1} parent=5 // pred_region
        %s217 = ssub.s32 %s15, 1
        // Predicated region
        $region13: #{tpu_custom_call.1} parent=11 // pred_check
          %p218 = pneg %p114
        $region14: #{tpu_custom_call.1} parent=11 // pred_check_branch
          %220 = sbr.rel (%p218) target = $region16
        $region15: #{tpu_custom_call.1} parent=11 // pred_region
          _
        $region16: #{tpu_custom_call.1} parent=11 // pred_fallthru
          _
        // Predicated region
        $region17: #{tpu_custom_call.1} parent=11 // pred_check
          %p221 = pneg %p135
        $region18: #{tpu_custom_call.1} parent=11 // pred_check_branch
          %223 = sbr.rel (%p221) target = $region20
        $region19: #{tpu_custom_call.1} parent=11 // pred_region
          _
        $region20: #{tpu_custom_call.1} parent=11 // pred_fallthru
          _
        // Predicated region
        $region21: #{tpu_custom_call.1} parent=11 // pred_check
          %p224 = pneg %p156
        $region22: #{tpu_custom_call.1} parent=11 // pred_check_branch
          %226 = sbr.rel (%p224) target = $region24
        $region23: #{tpu_custom_call.1} parent=11 // pred_region
          _
        $region24: #{tpu_custom_call.1} parent=11 // pred_fallthru
          _
        // Predicated region
        $region25: #{tpu_custom_call.1} parent=11 // pred_check
          %p227 = pneg %p177
        $region26: #{tpu_custom_call.1} parent=11 // pred_check_branch
          %229 = sbr.rel (%p227) target = $region28
        $region27: #{tpu_custom_call.1} parent=11 // pred_region
          _
        $region28: #{tpu_custom_call.1} parent=11 // pred_fallthru
          _
      $region12: #{tpu_custom_call.1} parent=5 // pred_fallthru
        _
      %p230 = scmp.lt.s32.totalorder %s15, 2
      // Predicated region
      $region29: #{tpu_custom_call.1} parent=5 // pred_check
        %p231 = pneg %p230
      $region30: #{tpu_custom_call.1} parent=5 // pred_check_branch
        %233 = sbr.rel (%p231) target = $region32
      $region31: #{tpu_custom_call.1} parent=5 // pred_region
        // Predicated region
        $region33: #{tpu_custom_call.1} parent=31 // pred_check
          %p234 = pneg %p35
        $region34: #{tpu_custom_call.1} parent=31 // pred_check_branch
          %236 = sbr.rel (%p234) target = $region36
        $region35: #{tpu_custom_call.1} parent=31 // pred_region
          %s237 = smul.u32 2, %s15
          %s238 = ssub.s32 3, %s237
          %p239 = scmp.lt.s32.totalorder %s238, 2
          %s240 = scalar_select %p239, %s238, 2
          %s241 = smul.u32 128, %s240
          %p242 = scmp.lt.s32.totalorder %s237, 2
          %s243 = scalar_select %p242, %s237, 2
          %s244 = smul.addr %s243, 8
          %s245 = scalar_lea.vmem %s0, %s244
          %s246 = smul.u32 2, %s15
          %s247 = ssub.s32 3, %s246
          %p248 = scmp.lt.s32.totalorder %s247, 2
          %s249 = scalar_select %p248, %s247, 2
          %s250 = smul.u32 128, %s249
        $region36: #{tpu_custom_call.1} parent=31 // pred_fallthru
          _
        // Predicated region
        $region37: #{tpu_custom_call.1} parent=31 // pred_check
          %p251 = pneg %p61
        $region38: #{tpu_custom_call.1} parent=31 // pred_check_branch
          %253 = sbr.rel (%p251) target = $region40
        $region39: #{tpu_custom_call.1} parent=31 // pred_region
          %s254 = smul.u32 2, %s15
          %s255 = ssub.s32 3, %s254
          %p256 = scmp.lt.s32.totalorder %s255, 2
          %s257 = scalar_select %p256, %s255, 2
          %s258 = smul.u32 128, %s257
          %p259 = scmp.lt.s32.totalorder %s254, 2
          %s260 = scalar_select %p259, %s254, 2
          %s261 = smul.addr %s260, 8
          %s262 = scalar_lea.vmem %s1, %s261
          %s263 = smul.u32 2, %s15
          %s264 = ssub.s32 3, %s263
          %p265 = scmp.lt.s32.totalorder %s264, 2
          %s266 = scalar_select %p265, %s264, 2
          %s267 = smul.u32 128, %s266
        $region40: #{tpu_custom_call.1} parent=31 // pred_fallthru
          _
        // Predicated region
        $region41: #{tpu_custom_call.1} parent=31 // pred_check
          %p268 = pneg %p87
        $region42: #{tpu_custom_call.1} parent=31 // pred_check_branch
          %270 = sbr.rel (%p268) target = $region44
        $region43: #{tpu_custom_call.1} parent=31 // pred_region
          %s271 = smul.u32 2, %s15
          %s272 = ssub.s32 3, %s271
          %p273 = scmp.lt.s32.totalorder %s272, 2
          %s274 = scalar_select %p273, %s272, 2
          %s275 = smul.u32 128, %s274
          %p276 = scmp.lt.s32.totalorder %s271, 2
          %s277 = scalar_select %p276, %s271, 2
          %s278 = smul.addr %s277, 8
          %s279 = scalar_lea.vmem %s2, %s278
          %s280 = smul.u32 2, %s15
          %s281 = ssub.s32 3, %s280
          %p282 = scmp.lt.s32.totalorder %s281, 2
          %s283 = scalar_select %p282, %s281, 2
          %s284 = smul.u32 128, %s283
        $region44: #{tpu_custom_call.1} parent=31 // pred_fallthru
          _
      $region32: #{tpu_custom_call.1} parent=5 // pred_fallthru
        _
      %p285 = scmp.le.s32.totalorder 1, %s15
      %p286 = scmp.lt.s32.totalorder %s15, 3
      %p287 = pnand %p285, %p286
      %p288 = pneg %p287
      // Predicated region
      $region45: #{tpu_custom_call.1} parent=5 // pred_check
        _
      $region46: #{tpu_custom_call.1} parent=5 // pred_check_branch
        %290 = sbr.rel (%p287) target = $region48
      $region47: #{tpu_custom_call.1} parent=5 // pred_region
        %s291 = ssub.s32 %s15, 1
        %s292 = smul.u32 2, %s20
        %s293 = ssub.s32 3, %s292
        %p294 = scmp.lt.s32.totalorder %s293, 2
        %s295 = scalar_select %p294, %s293, 2
        %s296 = smul.u32 128, %s295
        %p297 = scmp.lt.s32.totalorder %s292, 2
        %s298 = scalar_select %p297, %s292, 2
        %s299 = smul.addr %s298, 8
        %s300 = scalar_lea.vmem %s0, %s299
        %p301 = pneg %p41
        %p302 = pneg %p38
        %s303 = smul.u32 2, %s20
        %s304 = ssub.s32 3, %s303
        %p305 = scmp.lt.s32.totalorder %s304, 2
        %s306 = scalar_select %p305, %s304, 2
        %s307 = smul.u32 128, %s306
        %p308 = scmp.lt.s32.totalorder %s303, 2
        %s309 = scalar_select %p308, %s303, 2
        %s310 = smul.addr %s309, 8
        %s311 = scalar_lea.vmem %s1, %s310
        %p312 = pneg %p67
        %p313 = pneg %p64
        %s314 = smul.u32 2, %s20
        %s315 = ssub.s32 3, %s314
        %p316 = scmp.lt.s32.totalorder %s315, 2
        %s317 = scalar_select %p316, %s315, 2
        %s318 = smul.u32 128, %s317
        %p319 = scmp.lt.s32.totalorder %s314, 2
        %s320 = scalar_select %p319, %s314, 2
        %s321 = smul.addr %s320, 8
        %s322 = scalar_lea.vmem %s2, %s321
        %p323 = pneg %p93
        %p324 = pneg %p90
        %p325 = pneg %p114
        %p326 = pneg %p111
        %p327 = pneg %p135
        %p328 = pneg %p132
        %p329 = pneg %p156
        %p330 = pneg %p153
        %p331 = pneg %p177
        %p332 = pneg %p174
        %p333 = pneg %p203
        %p334 = pneg %p200
        %s335 = sand.u32 %s190, 1
        %s336 = sand.u32 %s190, 1
        %s337 = smul.addr %s336, 16
        %s338 = scalar_lea.vmem [#allocation3], %s337
        %s339 = smul.u32 2, %s20
        %s340 = ssub.s32 3, %s339
        %p341 = scmp.lt.s32.totalorder %s340, 2
        %s342 = scalar_select %p341, %s340, 2
        %s343 = smul.u32 128, %s342
        %p344 = scmp.lt.s32.totalorder %s339, 2
        %s345 = scalar_select %p344, %s339, 2
        %s346 = smul.addr %s345, 8
        %s347 = scalar_lea.vmem %s0, %s346
        %s348 = smul.u32 2, %s20
        %s349 = ssub.s32 3, %s348
        %p350 = scmp.lt.s32.totalorder %s349, 2
        %s351 = scalar_select %p350, %s349, 2
        %s352 = smul.u32 128, %s351
        %s353 = smul.u32 2, %s20
        %s354 = ssub.s32 3, %s353
        %p355 = scmp.lt.s32.totalorder %s354, 2
        %s356 = scalar_select %p355, %s354, 2
        %s357 = smul.u32 128, %s356
        %p358 = scmp.lt.s32.totalorder %s353, 2
        %s359 = scalar_select %p358, %s353, 2
        %s360 = smul.addr %s359, 8
        %s361 = scalar_lea.vmem %s1, %s360
        %s362 = smul.u32 2, %s20
        %s363 = ssub.s32 3, %s362
        %p364 = scmp.lt.s32.totalorder %s363, 2
        %s365 = scalar_select %p364, %s363, 2
        %s366 = smul.u32 128, %s365
        %s367 = smul.u32 2, %s20
        %s368 = ssub.s32 3, %s367
        %p369 = scmp.lt.s32.totalorder %s368, 2
        %s370 = scalar_select %p369, %s368, 2
        %s371 = smul.u32 128, %s370
        %p372 = scmp.lt.s32.totalorder %s367, 2
        %s373 = scalar_select %p372, %s367, 2
        %s374 = smul.addr %s373, 8
        %s375 = scalar_lea.vmem %s2, %s374
        %s376 = smul.u32 2, %s20
        %s377 = ssub.s32 3, %s376
        %p378 = scmp.lt.s32.totalorder %s377, 2
        %s379 = scalar_select %p378, %s377, 2
        %s380 = smul.u32 128, %s379
        %s381 = smul.u32 2, %s20
        %s382 = ssub.s32 3, %s381
        %p383 = scmp.lt.s32.totalorder %s382, 2
        %s384 = scalar_select %p383, %s382, 2
        %s385 = smul.u32 128, %s384
        %v386 = vld [vmem:[%s347] sm:$0xff]
        %v387 = vld [vmem:[%s347 + $0x8] sm:$0xff]
        %v388 = vld [vmem:[%s3] sm:$0xff]
        %v389 = vld [vmem:[%s3 + $0x8] sm:$0xff]
        %v390 = vld [vmem:[%s3 + $0x10] sm:$0xff]
        %v391 = vld [vmem:[%s3 + $0x18] sm:$0xff]
        %v392 = vld [vmem:[%s3 + $0x20] sm:$0xff]
        %v393 = vld [vmem:[%s3 + $0x28] sm:$0xff]
        %v394 = vld [vmem:[%s3 + $0x30] sm:$0xff]
        %v395 = vld [vmem:[%s3 + $0x38] sm:$0xff]
        %v396 = vld [vmem:[%s3 + $0x40] sm:$0xff]
        %v397 = vld [vmem:[%s3 + $0x48] sm:$0xff]
        %v398 = vld [vmem:[%s3 + $0x50] sm:$0xff]
        %v399 = vld [vmem:[%s3 + $0x58] sm:$0xff]
        %v400 = vld [vmem:[%s3 + $0x60] sm:$0xff]
        %v401 = vld [vmem:[%s3 + $0x68] sm:$0xff]
        %v402 = vld [vmem:[%s3 + $0x70] sm:$0xff]
        %v403 = vld [vmem:[%s3 + $0x78] sm:$0xff]
        %v404 = vld [vmem:[%s361] sm:$0xff]
        %v405 = vld [vmem:[%s361 + $0x8] sm:$0xff]
        %v406 = vld [vmem:[%s4] sm:$0xff]
        %v407 = vld [vmem:[%s4 + $0x8] sm:$0xff]
        %v408 = vld [vmem:[%s4 + $0x10] sm:$0xff]
        %v409 = vld [vmem:[%s4 + $0x18] sm:$0xff]
        %v410 = vld [vmem:[%s4 + $0x20] sm:$0xff]
        %v411 = vld [vmem:[%s4 + $0x28] sm:$0xff]
        %v412 = vld [vmem:[%s4 + $0x30] sm:$0xff]
        %v413 = vld [vmem:[%s4 + $0x38] sm:$0xff]
        %v414 = vld [vmem:[%s4 + $0x40] sm:$0xff]
        %v415 = vld [vmem:[%s4 + $0x48] sm:$0xff]
        %v416 = vld [vmem:[%s4 + $0x50] sm:$0xff]
        %v417 = vld [vmem:[%s4 + $0x58] sm:$0xff]
        %v418 = vld [vmem:[%s4 + $0x60] sm:$0xff]
        %v419 = vld [vmem:[%s4 + $0x68] sm:$0xff]
        %v420 = vld [vmem:[%s4 + $0x70] sm:$0xff]
        %v421 = vld [vmem:[%s4 + $0x78] sm:$0xff]
        %422 = vmatprep.subr.mxu0 0.0
        %423 = vmatpush1.msra.mxu0 %v421
        %424 = vmatprep.subr.mxu0 0.0
        %425 = vmatpush1.msra.mxu0 %v420
        %426 = vmatprep.subr.mxu0 0.0
        %427 = vmatpush1.msra.mxu0 %v419
        %428 = vmatprep.subr.mxu0 0.0
        %429 = vmatpush1.msra.mxu0 %v418
        %430 = vmatprep.subr.mxu0 0.0
        %431 = vmatpush1.msra.mxu0 %v417
        %432 = vmatprep.subr.mxu0 0.0
        %433 = vmatpush1.msra.mxu0 %v416
        %434 = vmatprep.subr.mxu0 0.0
        %435 = vmatpush1.msra.mxu0 %v415
        %436 = vmatprep.subr.mxu0 0.0
        %437 = vmatpush1.msra.mxu0 %v414
        %438 = vmatprep.subr.mxu0 0.0
        %439 = vmatpush1.msra.mxu0 %v413
        %440 = vmatprep.subr.mxu0 0.0
        %441 = vmatpush1.msra.mxu0 %v412
        %442 = vmatprep.subr.mxu0 0.0
        %443 = vmatpush1.msra.mxu0 %v411
        %444 = vmatprep.subr.mxu0 0.0
        %445 = vmatpush1.msra.mxu0 %v410
        %446 = vmatprep.subr.mxu0 0.0
        %447 = vmatpush1.msra.mxu0 %v409
        %448 = vmatprep.subr.mxu0 0.0
        %449 = vmatpush1.msra.mxu0 %v408
        %450 = vmatprep.subr.mxu0 0.0
        %451 = vmatpush1.msra.mxu0 %v407
        %452 = vmatprep.subr.mxu0 0.0
        %453 = vmatpush1.msra.mxu0 %v406
        %454 = vmatprep.subr.mxu0 0.0
        %455 = vmatpush2.msra.mxu0 0.0
        %456 = vmatprep.subr.mxu0 0.0
        %457 = vmatpush2.msra.mxu0 0.0
        %458 = vmatprep.subr.mxu0 0.0
        %459 = vmatpush2.msra.mxu0 0.0
        %460 = vmatprep.subr.mxu0 0.0
        %461 = vmatpush2.msra.mxu0 0.0
        %462 = vmatprep.subr.mxu0 0.0
        %463 = vmatpush2.msra.mxu0 0.0
        %464 = vmatprep.subr.mxu0 0.0
        %465 = vmatpush2.msra.mxu0 0.0
        %466 = vmatprep.subr.mxu0 0.0
        %467 = vmatpush2.msra.mxu0 0.0
        %468 = vmatprep.subr.mxu0 0.0
        %469 = vmatpush2.msra.mxu0 0.0
        %470 = vmatprep.subr.mxu0 0.0
        %471 = vmatpush2.msra.mxu0 0.0
        %472 = vmatprep.subr.mxu0 0.0
        %473 = vmatpush2.msra.mxu0 0.0
        %474 = vmatprep.subr.mxu0 0.0
        %475 = vmatpush2.msra.mxu0 0.0
        %476 = vmatprep.subr.mxu0 0.0
        %477 = vmatpush2.msra.mxu0 0.0
        %478 = vmatprep.subr.mxu0 0.0
        %479 = vmatpush2.msra.mxu0 0.0
        %480 = vmatprep.subr.mxu0 0.0
        %481 = vmatpush2.msra.mxu0 0.0
        %482 = vmatprep.subr.mxu0 0.0
        %483 = vmatpush2.msra.mxu0 0.0
        %484 = vmatprep.subr.mxu0 0.0
        %485 = vmatpush2.msra.mxu0 0.0
        %486 = vmatprep.mubr.f32.mxu0 0.0
        %487 = vmatmul.mubr.f32.gmra.mxu0 %v404
        %v488 = vpop.f32.mrf.mxu0
        %v489 = vadd.f32 0.0, %v488
        %v490 = vpop.f32.mrf.mxu0
        %491 = vmatprep.mubr.f32.mxu0 0.0
        %492 = vmatmul.mubr.f32.gmra.mxu0 %v405
        %v493 = vpop.f32.mrf.mxu0
        %v494 = vadd.f32 0.0, %v493
        %v495 = vpop.f32.mrf.mxu0
        %496 = vdwg.mxu0
        %497 = vmatprep.subr.mxu0 0.0
        %498 = vmatpush1.msra.mxu0 %v403
        %499 = vmatprep.subr.mxu0 0.0
        %500 = vmatpush1.msra.mxu0 %v402
        %501 = vmatprep.subr.mxu0 0.0
        %502 = vmatpush1.msra.mxu0 %v401
        %503 = vmatprep.subr.mxu0 0.0
        %504 = vmatpush1.msra.mxu0 %v400
        %505 = vmatprep.subr.mxu0 0.0
        %506 = vmatpush1.msra.mxu0 %v399
        %507 = vmatprep.subr.mxu0 0.0
        %508 = vmatpush1.msra.mxu0 %v398
        %509 = vmatprep.subr.mxu0 0.0
        %510 = vmatpush1.msra.mxu0 %v397
        %511 = vmatprep.subr.mxu0 0.0
        %512 = vmatpush1.msra.mxu0 %v396
        %513 = vmatprep.subr.mxu0 0.0
        %514 = vmatpush1.msra.mxu0 %v395
        %515 = vmatprep.subr.mxu0 0.0
        %516 = vmatpush1.msra.mxu0 %v394
        %517 = vmatprep.subr.mxu0 0.0
        %518 = vmatpush1.msra.mxu0 %v393
        %519 = vmatprep.subr.mxu0 0.0
        %520 = vmatpush1.msra.mxu0 %v392
        %521 = vmatprep.subr.mxu0 0.0
        %522 = vmatpush1.msra.mxu0 %v391
        %523 = vmatprep.subr.mxu0 0.0
        %524 = vmatpush1.msra.mxu0 %v390
        %525 = vmatprep.subr.mxu0 0.0
        %526 = vmatpush1.msra.mxu0 %v389
        %527 = vmatprep.subr.mxu0 0.0
        %528 = vmatpush1.msra.mxu0 %v388
        %529 = vmatprep.subr.mxu0 0.0
        %530 = vmatpush2.msra.mxu0 0.0
        %531 = vmatprep.subr.mxu0 0.0
        %532 = vmatpush2.msra.mxu0 0.0
        %533 = vmatprep.subr.mxu0 0.0
        %534 = vmatpush2.msra.mxu0 0.0
        %535 = vmatprep.subr.mxu0 0.0
        %536 = vmatpush2.msra.mxu0 0.0
        %537 = vmatprep.subr.mxu0 0.0
        %538 = vmatpush2.msra.mxu0 0.0
        %539 = vmatprep.subr.mxu0 0.0
        %540 = vmatpush2.msra.mxu0 0.0
        %541 = vmatprep.subr.mxu0 0.0
        %542 = vmatpush2.msra.mxu0 0.0
        %543 = vmatprep.subr.mxu0 0.0
        %544 = vmatpush2.msra.mxu0 0.0
        %545 = vmatprep.subr.mxu0 0.0
        %546 = vmatpush2.msra.mxu0 0.0
        %547 = vmatprep.subr.mxu0 0.0
        %548 = vmatpush2.msra.mxu0 0.0
        %549 = vmatprep.subr.mxu0 0.0
        %550 = vmatpush2.msra.mxu0 0.0
        %551 = vmatprep.subr.mxu0 0.0
        %552 = vmatpush2.msra.mxu0 0.0
        %553 = vmatprep.subr.mxu0 0.0
        %554 = vmatpush2.msra.mxu0 0.0
        %555 = vmatprep.subr.mxu0 0.0
        %556 = vmatpush2.msra.mxu0 0.0
        %557 = vmatprep.subr.mxu0 0.0
        %558 = vmatpush2.msra.mxu0 0.0
        %559 = vmatprep.subr.mxu0 0.0
        %560 = vmatpush2.msra.mxu0 0.0
        %561 = vmatprep.mubr.f32.mxu0 0.0
        %562 = vmatmul.mubr.f32.gmra.mxu0 %v386
        %v563 = vpop.f32.mrf.mxu0
        %v564 = vadd.f32 %v489, %v563
        %v565 = vpop.f32.mrf.mxu0
        %566 = vmatprep.mubr.f32.mxu0 0.0
        %567 = vmatmul.mubr.f32.gmra.mxu0 %v387
        %v568 = vpop.f32.mrf.mxu0
        %v569 = vadd.f32 %v494, %v568
        %v570 = vpop.f32.mrf.mxu0
        %571 = vdwg.mxu0
        %v572 = vld [vmem:[%s375] sm:$0xff]
        %v573 = vld [vmem:[%s375 + $0x8] sm:$0xff]
        %v574 = vld [vmem:[%s5] sm:$0x1]
        %v576 = vlaneseq
        %v577 = vshrl.u32 %v576, 7
        %v578 = vsub.s32 0, %v577
        %v579 = vrot.slane %v574, %v578
        %v581 = vmul.f32 %v572, %v579
        %v582 = vmul.f32 %v573, %v579
        %vm583 = vcmask 31744
        %v584 = vsel %vm583, %v581, 0.0
        %585 = vadd.xlane.f32.xlu0 %v584
        %v586 = vpop.xlane.xlu0 %585
        %v587 = vsel %vm583, %v582, 0.0
        %588 = vadd.xlane.f32.xlu0 %v587
        %v589 = vpop.xlane.xlu0 %588
        %v590 = vadd.f32 %v564, %v586
        %v591 = vadd.f32 %v569, %v589
        %v592 = vld [vmem:[#allocation2] sm:$0x1]
        %v594 = vlaneseq
        %v595 = vshrl.u32 %v594, 7
        %v596 = vsub.s32 0, %v595
        %v597 = vrot.slane %v592, %v596
        %v599 = vadd.f32 %v590, %v597
        %v600 = vadd.f32 %v591, %v597
        %vm601 = vcmask 7168
        %602 = vst.msk [vmem:[%s338] sm:$0xff] %vm601, %v599
        %603 = vst.msk [vmem:[%s338 + $0x8] sm:$0xff] %vm601, %v600
        %s604 = sand.u32 %s190, 1
        %s605 = sand.u32 %s190, 1
        %s606 = smul.addr %s605, 16
        %s607 = scalar_lea.vmem [#allocation3], %s606
        // Predicated region
        $region49: #{tpu_custom_call.1} parent=47 // pred_check
          %p608 = pneg %p200
        $region50: #{tpu_custom_call.1} parent=47 // pred_check_branch
          %610 = sbr.rel (%p608) target = $region52
        $region51: #{tpu_custom_call.1} parent=47 // pred_region
          %s611 = smul.u32 2, %s20
          %s612 = ssub.s32 3, %s611
          %p613 = scmp.lt.s32.totalorder %s612, 2
          %s614 = scalar_select %p613, %s612, 2
          %s615 = smul.u32 128, %s614
          %p616 = scmp.ne.s32.totalorder 0, %s615
          %s617 = smul.addr %s611, 8
          %s618 = scalar_lea.vmem %s7, %s617
          // Predicated region
          $region53: #{tpu_custom_call.1} parent=51 // pred_check
            %p619 = pneg %p616
          $region54: #{tpu_custom_call.1} parent=51 // pred_check_branch
            %621 = sbr.rel (%p619) target = $region56
          $region55: #{tpu_custom_call.1} parent=51 // pred_region
            // Predicated region
            $region57: #{tpu_custom_call.1} parent=55 // pred_check
              _
            $region58: #{tpu_custom_call.1} parent=55 // pred_check_branch
              %623 = sbr.rel (0) target = $region60
            $region59: #{tpu_custom_call.1} parent=55 // pred_region
              // Predicated region
              $region79: #{tpu_custom_call.1} parent=59 // pred_check
                _
              $region80: #{tpu_custom_call.1} parent=59 // pred_check_branch
                %675 = sbr.rel (0) target = $region82
              $region81: #{tpu_custom_call.1} parent=59 // pred_region
                %s676 = sshrl.u32 %s614, 1
                // While loop
                $region83: #{tpu_custom_call.1} parent=81 // loop_pre_header
                  _
                $region84: #{tpu_custom_call.1} parent=81 // loop_header
                  %s678 = sphi 0, %s680
                  %p679 = scmp.ge.s32.totalorder %s678, %s676
                  %s683 = sphi 0, %s692
                  %s684 = sphi %s607, %s695
                  %s685 = sphi %s618, %s696
                $region85: #{tpu_custom_call.1} parent=81 // loop_header_branch
                  %682 = sbr.rel (%p679) target = $region89
                $region86: #{tpu_custom_call.1} parent=81 // loop_body
                  %v686 = vld [vmem:[%s684] sm:$0xff]
                  %687 = vst [vmem:[%s685] sm:$0xff] %v686
                  %v688 = vld [vmem:[%s684 + $0x8] sm:$0xff]
                  %689 = vst [vmem:[%s685 + $0x8] sm:$0xff] %v688
                  %s690 = sadd.s32 1, %s683
                  %p691 = scmp.ge.s32.totalorder %s690, %s676
                  %s692 = scalar_select %p691, 0, %s690
                  %s693 = smul.u32 %s692, 16
                  %s694 = smul.u32 %s692, 16
                  %s695 = scalar_lea.vmem %s607, %s693 [#allocation3]
                  %s696 = scalar_lea.vmem %s618, %s694
                $region87: #{tpu_custom_call.1} parent=81 // loop_footer
                  %s680 = sadd.s32 %s678, 1
                $region88: #{tpu_custom_call.1} parent=81 // loop_footer_branch
                  %677 = sbr.rel target = $region84
                $region89: #{tpu_custom_call.1} parent=81 // loop_exit
                  _
                %s697 = sshrl.u32 %s614, 1
                %s698 = sand.u32 %s614, 1
                %s699 = smul.u32 %s697, 2
                %s700 = smul.u32 8, %s699
                %s701 = scalar_lea.vmem %s607, %s700 [#allocation3]
                %s702 = smul.u32 8, %s699
                %s703 = scalar_lea.vmem %s618, %s702
                // While loop
                $region90: #{tpu_custom_call.1} parent=81 // loop_pre_header
                  _
                $region91: #{tpu_custom_call.1} parent=81 // loop_header
                  %s705 = sphi 0, %s707
                  %p706 = scmp.ge.s32.totalorder %s705, %s698
                  %s710 = sphi 0, %s717
                  %s711 = sphi %s701, %s720
                  %s712 = sphi %s703, %s721
                $region92: #{tpu_custom_call.1} parent=81 // loop_header_branch
                  %709 = sbr.rel (%p706) target = $region96
                $region93: #{tpu_custom_call.1} parent=81 // loop_body
                  %v713 = vld [vmem:[%s711] sm:$0xff]
                  %714 = vst [vmem:[%s712] sm:$0xff] %v713
                  %s715 = sadd.s32 1, %s710
                  %p716 = scmp.ge.s32.totalorder %s715, %s698
                  %s717 = scalar_select %p716, 0, %s715
                  %s718 = smul.u32 %s717, 8
                  %s719 = smul.u32 %s717, 8
                  %s720 = scalar_lea.vmem %s701, %s718 [#allocation3]
                  %s721 = scalar_lea.vmem %s703, %s719
                $region94: #{tpu_custom_call.1} parent=81 // loop_footer
                  %s707 = sadd.s32 %s705, 1
                $region95: #{tpu_custom_call.1} parent=81 // loop_footer_branch
                  %704 = sbr.rel target = $region91
                $region96: #{tpu_custom_call.1} parent=81 // loop_exit
                  _
              $region82: #{tpu_custom_call.1} parent=59 // pred_fallthru
                _
              // Predicated region
              $region97: #{tpu_custom_call.1} parent=59 // pred_check
                _
              $region98: #{tpu_custom_call.1} parent=59 // pred_check_branch
                %723 = sbr.rel target = $region100
              $region99: #{tpu_custom_call.1} parent=59 // pred_region
                _
              $region100: #{tpu_custom_call.1} parent=59 // pred_fallthru
                _
            $region60: #{tpu_custom_call.1} parent=55 // pred_fallthru
              _
            // Predicated region
            $region61: #{tpu_custom_call.1} parent=55 // pred_check
              _
            $region62: #{tpu_custom_call.1} parent=55 // pred_check_branch
              %625 = sbr.rel target = $region64
            $region63: #{tpu_custom_call.1} parent=55 // pred_region
              %s627 = ssub.s32 256, 1
              %s628 = sshrl.u32 %s614, 1
              // While loop
              $region65: #{tpu_custom_call.1} parent=63 // loop_pre_header
                _
              $region66: #{tpu_custom_call.1} parent=63 // loop_header
                %s630 = sphi 0, %s632
                %p631 = scmp.ge.s32.totalorder %s630, %s628
                %s635 = sphi 0, %s644
                %s636 = sphi %s607, %s647
                %s637 = sphi %s618, %s648
              $region67: #{tpu_custom_call.1} parent=63 // loop_header_branch
                %634 = sbr.rel (%p631) target = $region71
              $region68: #{tpu_custom_call.1} parent=63 // loop_body
                %v638 = vld [vmem:[%s636] sm:%s627]
                %639 = vst [vmem:[%s637] sm:%s627] %v638
                %v640 = vld [vmem:[%s636 + $0x8] sm:%s627]
                %641 = vst [vmem:[%s637 + $0x8] sm:%s627] %v640
                %s642 = sadd.s32 1, %s635
                %p643 = scmp.ge.s32.totalorder %s642, %s628
                %s644 = scalar_select %p643, 0, %s642
                %s645 = smul.u32 %s644, 16
                %s646 = smul.u32 %s644, 16
                %s647 = scalar_lea.vmem %s607, %s645 [#allocation3]
                %s648 = scalar_lea.vmem %s618, %s646
              $region69: #{tpu_custom_call.1} parent=63 // loop_footer
                %s632 = sadd.s32 %s630, 1
              $region70: #{tpu_custom_call.1} parent=63 // loop_footer_branch
                %629 = sbr.rel target = $region66
              $region71: #{tpu_custom_call.1} parent=63 // loop_exit
                _
              %s649 = sshrl.u32 %s614, 1
              %s650 = sand.u32 %s614, 1
              %s651 = smul.u32 %s649, 2
              %s652 = smul.u32 8, %s651
              %s653 = scalar_lea.vmem %s607, %s652 [#allocation3]
              %s654 = smul.u32 8, %s651
              %s655 = scalar_lea.vmem %s618, %s654
              // While loop
              $region72: #{tpu_custom_call.1} parent=63 // loop_pre_header
                _
              $region73: #{tpu_custom_call.1} parent=63 // loop_header
                %s657 = sphi 0, %s659
                %p658 = scmp.ge.s32.totalorder %s657, %s650
                %s662 = sphi 0, %s669
                %s663 = sphi %s653, %s672
                %s664 = sphi %s655, %s673
              $region74: #{tpu_custom_call.1} parent=63 // loop_header_branch
                %661 = sbr.rel (%p658) target = $region78
              $region75: #{tpu_custom_call.1} parent=63 // loop_body
                %v665 = vld [vmem:[%s663] sm:%s627]
                %666 = vst [vmem:[%s664] sm:%s627] %v665
                %s667 = sadd.s32 1, %s662
                %p668 = scmp.ge.s32.totalorder %s667, %s650
                %s669 = scalar_select %p668, 0, %s667
                %s670 = smul.u32 %s669, 8
                %s671 = smul.u32 %s669, 8
                %s672 = scalar_lea.vmem %s653, %s670 [#allocation3]
                %s673 = scalar_lea.vmem %s655, %s671
              $region76: #{tpu_custom_call.1} parent=63 // loop_footer
                %s659 = sadd.s32 %s657, 1
              $region77: #{tpu_custom_call.1} parent=63 // loop_footer_branch
                %656 = sbr.rel target = $region73
              $region78: #{tpu_custom_call.1} parent=63 // loop_exit
                _
            $region64: #{tpu_custom_call.1} parent=55 // pred_fallthru
              _
          $region56: #{tpu_custom_call.1} parent=51 // pred_fallthru
            _
          %724 = vnop
        $region52: #{tpu_custom_call.1} parent=47 // pred_fallthru
          _
      $region48: #{tpu_custom_call.1} parent=5 // pred_fallthru
        _
      %p725 = scmp.le.s32.totalorder 2, %s15
      // Predicated region
      $region101: #{tpu_custom_call.1} parent=5 // pred_check
        %p726 = pneg %p725
      $region102: #{tpu_custom_call.1} parent=5 // pred_check_branch
        %728 = sbr.rel (%p726) target = $region104
      $region103: #{tpu_custom_call.1} parent=5 // pred_region
        %s729 = ssub.s32 %s15, 2
        // Predicated region
        $region105: #{tpu_custom_call.1} parent=103 // pred_check
          %p730 = pneg %p206
        $region106: #{tpu_custom_call.1} parent=103 // pred_check_branch
          %732 = sbr.rel (%p730) target = $region108
        $region107: #{tpu_custom_call.1} parent=103 // pred_region
          %s733 = sand.u32 %s191, 1
          %s734 = sand.u32 %s191, 1
          %s735 = smul.addr %s734, 16
          %s736 = scalar_lea.vmem [#allocation3], %s735
        $region108: #{tpu_custom_call.1} parent=103 // pred_fallthru
          _
      $region104: #{tpu_custom_call.1} parent=5 // pred_fallthru
        _
    $region6: #{tpu_custom_call.1} parent=1 // loop_footer
      %s19 = sadd.s32 1, %s15
    $region7: #{tpu_custom_call.1} parent=1 // loop_footer_branch
      %14 = sbr.rel target = $region3
    $region8: #{tpu_custom_call.1} parent=1 // loop_exit
      _

</llo_original>
